<compile_context>
chip_gen: v7x
topology: tpu7x:2x2x1
jax: 0.10.0
libtpu: 0.0.40
codegen_flags: <defaults>
</compile_context>

<pallas_src>
import math

import jax
import jax.numpy as jnp
from jax.experimental import pallas as pl
from jax.experimental.pallas import tpu as pltpu


# --------------------------------------------------------------------------
# helpers
# --------------------------------------------------------------------------
def _round_up(x, m):
    return ((x + m - 1) // m) * m


def _out_pack_factor(E):
    """Batch rows packed per 128-lane output row (lane-dense store)."""
    return 128 // E if (E < 128 and 128 % E == 0) else 1


# --------------------------------------------------------------------------
# Kernel
# --------------------------------------------------------------------------
def _make_kernel(P, g):
    """P = output row-packing factor, g = block_b // P (packed rows / step)."""

    def kernel(x_ref, wbd_ref, qsel0_ref, qsel1_ref, vsel0_ref, vsel1_ref,
               wopad_ref, bo_ref, out_ref):
        f32, bf16 = jnp.float32, jnp.bfloat16

        # (1) fused projections + bias + mask injection: ONE bf16 MXU matmul.
        #     kv lanes: [k0 | v0 | k1 | v1 | mask0 | mask1]   (bm, 4E+2) f32
        kv = jnp.dot(x_ref[...], wbd_ref[...], preferred_element_type=f32)
        kv_b = kv.astype(bf16)

        # (2) per-head scores for each modality (mask bias already folded into
        #     the selector's ones-row; scale folded into the q block).
        s0 = jnp.dot(kv_b, qsel0_ref[...], preferred_element_type=f32)   # (bm, H)
        s1 = jnp.dot(kv_b, qsel1_ref[...], preferred_element_type=f32)   # (bm, H)

        # (3) softmax over the 2 modalities, f32 VPU/EUP math.
        m = jnp.maximum(s0, s1)
        e0 = jnp.exp(s0 - m)
        e1 = jnp.exp(s1 - m)
        inv = pl.reciprocal(e0 + e1, approx=False)          # exact, EUP slot
        a0 = (e0 * inv).astype(bf16)
        a1 = (e1 * inv).astype(bf16)

        # (4) head -> lane broadcast of the attention weights; av is nonzero
        #     only in the v0/v1 lane ranges, so k/mask lanes vanish below.
        av = (jnp.dot(a0, vsel0_ref[...], preferred_element_type=f32) +
              jnp.dot(a1, vsel1_ref[...], preferred_element_type=f32))   # (bm, 4E+2)
        attn = (av * kv).astype(bf16)

        # (5) output projection (wopad has wo in both v row-blocks, 0 elsewhere)
        out2d = jnp.dot(attn, wopad_ref[...], preferred_element_type=f32) \
            + bo_ref[...]                                                # (bm, E)

        # (6) lane-dense packed store: P row-groups side by side in lanes.
        if P > 1:
            packed = jnp.concatenate(
                [out2d[j * g:(j + 1) * g, :] for j in range(P)], axis=1)
        else:
            packed = out2d
        out_ref[...] = packed.astype(out_ref.dtype)

    return kernel


# --------------------------------------------------------------------------
# Wrapper-side weight fusion (done once, outside the kernel; fold in f32,
# store bf16 per the review's correctness note)
# --------------------------------------------------------------------------
def prepare_fused_params(params, num_heads, input_dims):
    E = params["wo"].shape[0]
    H = num_heads
    hd = E // H
    D0, D1 = input_dims
    F = 4 * E + 2            # kv lanes: [k0 | v0 | k1 | v1 | mask0 | mask1]
    Din = D0 + D1 + 3        # x  lanes: [mod0 | mod1 | mask0 | mask1 | ones]
    f32, bf16 = jnp.float32, jnp.bfloat16

    wkv = jnp.concatenate([params["wk"], params["wv"]], axis=1)      # (E, 2E)
    bkv = jnp.concatenate([params["bk"], params["bv"]], axis=1)      # (1, 2E)

    # Block-diagonal projection weight (biases fed by the constant-1 column,
    # key_padding_mask passed through with identity weights).
    wbd = jnp.zeros((Din, F), f32)
    wbd = wbd.at[0:D0, 0:2 * E].set(params["w0"].astype(f32) @ wkv)
    wbd = wbd.at[D0:D0 + D1, 2 * E:4 * E].set(params["w1"].astype(f32) @ wkv)
    wbd = wbd.at[D0 + D1, 4 * E].set(1.0)                            # mask0
    wbd = wbd.at[D0 + D1 + 1, 4 * E + 1].set(1.0)                    # mask1
    wbd = wbd.at[D0 + D1 + 2, 0:2 * E].set((params["b0"] @ wkv + bkv)[0])
    wbd = wbd.at[D0 + D1 + 2, 2 * E:4 * E].set((params["b1"] @ wkv + bkv)[0])

    # Pre-scaled, pre-projected fusion query baked into per-head selectors.
    qp = ((params["q"] @ params["wq"] + params["bq"]) / math.sqrt(hd))[0]  # (E,)
    head_ids = jnp.arange(E) // hd
    hsel = (head_ids[:, None] == jnp.arange(H)[None, :]).astype(f32)       # (E, H)

    qsel0 = jnp.zeros((F, H), f32).at[0:E, :].set(qp[:, None] * hsel)
    qsel0 = qsel0.at[4 * E, :].set(1.0)                              # + mask0 bias
    qsel1 = jnp.zeros((F, H), f32).at[2 * E:3 * E, :].set(qp[:, None] * hsel)
    qsel1 = qsel1.at[4 * E + 1, :].set(1.0)                          # + mask1 bias

    vsel0 = jnp.zeros((H, F), f32).at[:, E:2 * E].set(hsel.T)
    vsel1 = jnp.zeros((H, F), f32).at[:, 3 * E:4 * E].set(hsel.T)

    # TODO(synk): when E % 128 == 0, drop the zero rows here and slice kv's
    #             v-halves with aligned 128-lane slices in-kernel instead.
    wopad = jnp.zeros((F, E), f32).at[E:2 * E, :].set(params["wo"])
    wopad = wopad.at[3 * E:4 * E, :].set(params["wo"])

    return {
        "wbd": wbd.astype(bf16),
        "qsel0": qsel0.astype(bf16), "qsel1": qsel1.astype(bf16),
        "vsel0": vsel0.astype(bf16), "vsel1": vsel1.astype(bf16),
        "wopad": wopad.astype(bf16),
        "bo": params["bo"].astype(f32),
    }


# --------------------------------------------------------------------------
# pallas_call wrapper
# --------------------------------------------------------------------------
def aecf_fusion(x_aug, fused, *, E, block_b):
    Bp, Din = x_aug.shape
    P = _out_pack_factor(E)
    align = max(16, 8 * P)                  # bf16 sublane packing + packed rows
    assert block_b % align == 0 and Bp % block_b == 0
    g = block_b // P
    grid = (Bp // block_b,)

    def full(a):
        return pl.BlockSpec(a.shape, lambda i: (0, 0))

    grid_spec = pltpu.PrefetchScalarGridSpec(
        num_scalar_prefetch=0,
        grid=grid,
        in_specs=[
            pl.BlockSpec((block_b, Din), lambda i: (i, 0)),      # activations
            full(fused["wbd"]),
            full(fused["qsel0"]), full(fused["qsel1"]),
            full(fused["vsel0"]), full(fused["vsel1"]),
            full(fused["wopad"]), full(fused["bo"]),
        ],
        out_specs=pl.BlockSpec((g, P * E), lambda i: (i, 0)),
    )

    out_packed = pl.pallas_call(
        _make_kernel(P, g),
        out_shape=jax.ShapeDtypeStruct((Bp // P, P * E), jnp.float32),
        grid_spec=grid_spec,
        compiler_params=pltpu.CompilerParams(
            dimension_semantics=("parallel",),       # batch shards across TCs
            vmem_limit_bytes=32 * 1024 * 1024),
    )(x_aug, fused["wbd"], fused["qsel0"], fused["qsel1"],
      fused["vsel0"], fused["vsel1"], fused["wopad"], fused["bo"])

    if P > 1:   # undo the block-grouped lane packing of the output
        nblk = grid[0]
        out = out_packed.reshape(nblk, g, P, E).transpose(0, 2, 1, 3).reshape(Bp, E)
    else:
        out = out_packed
    return out


def aecf_fusion_forward(modalities, original_modalities, params, *,
                        num_heads=8, block_b=None):
    """Full forward: mask construction + weight fusion + kernel call."""
    mod0, mod1 = modalities
    B, D0 = mod0.shape
    _, D1 = mod1.shape
    E = params["wo"].shape[0]

    # key_padding_mask -> additive -1e30 bias, appended as 2 input lanes.
    if original_modalities is not None and len(original_modalities) == 2:
        orig0, orig1 = original_modalities
        img_present = jnp.linalg.norm(orig0, axis=1) > 1e-6
        txt_present = jnp.linalg.norm(orig1, axis=1) > 1e-6
        mask0 = jnp.where(img_present, 0.0, -1e30).astype(jnp.float32)
        mask1 = jnp.where(txt_present, 0.0, -1e30).astype(jnp.float32)
    else:
        mask0 = jnp.zeros((B,), jnp.float32)
        mask1 = jnp.zeros((B,), jnp.float32)

    ones = jnp.ones((B, 1), jnp.float32)
    x_aug = jnp.concatenate(
        [mod0.astype(jnp.float32), mod1.astype(jnp.float32),
         mask0[:, None], mask1[:, None], ones], axis=1).astype(jnp.bfloat16)

    # Block sizing: ~512-row tiles at large B (grid >= 2 -> software pipelining
    # and v7x dual-TC sharding); weights are fetched once either way.
    P = _out_pack_factor(E)
    align = max(16, 8 * P)
    if block_b is None:
        n_blocks = max(1, pl.cdiv(B, 512))
        block_b = _round_up(pl.cdiv(B, n_blocks), align)
    else:
        block_b = _round_up(block_b, align)
    Bp = _round_up(B, block_b)
    if Bp != B:
        x_aug = jnp.pad(x_aug, ((0, Bp - B), (0, 0)))   # padded rows stay finite

    fused = prepare_fused_params(params, num_heads, (D0, D1))
    out = aecf_fusion(x_aug, fused, E=E, block_b=block_b)
    return out[:B]


# --------------------------------------------------------------------------
# Pure-JAX reference of the PyTorch forward (eval mode)
# --------------------------------------------------------------------------
def reference(mod0, mod1, kpm_bool, params, *, num_heads=8):
    E = params["wo"].shape[0]
    H = num_heads
    hd = E // H
    B = mod0.shape[0]

    p0 = mod0 @ params["w0"] + params["b0"]
    p1 = mod1 @ params["w1"] + params["b1"]
    stacked = jnp.stack([p0, p1], axis=1)                     # (B, 2, E)

    qp = params["q"] @ params["wq"] + params["bq"]            # (1, E)
    k = stacked @ params["wk"] + params["bk"]                 # (B, 2, E)
    v = stacked @ params["wv"] + params["bv"]

    qh = qp.reshape(H, hd)
    kh = k.reshape(B, 2, H, hd)
    vh = v.reshape(B, 2, H, hd)

    scores = jnp.einsum("hd,bmhd->bhm", qh, kh) / math.sqrt(hd)
    scores = jnp.where(kpm_bool[:, None, :], -jnp.inf, scores)
    attn = jax.nn.softmax(scores, axis=-1)
    out = jnp.einsum("bhm,bmhd->bhd", attn, vh).reshape(B, E)
    return out @ params["wo"] + params["bo"]


def init_params(key, input_dims, output_dim):
    E = output_dim
    keys = jax.random.split(key, 13)
    p = {}
    p["w0"] = jax.random.normal(keys[0], (input_dims[0], E), jnp.float32) * 0.05
    p["b0"] = jax.random.normal(keys[1], (1, E), jnp.float32) * 0.05
    p["w1"] = jax.random.normal(keys[2], (input_dims[1], E), jnp.float32) * 0.05
    p["b1"] = jax.random.normal(keys[3], (1, E), jnp.float32) * 0.05
    p["q"] = jax.random.normal(keys[4], (1, E), jnp.float32) * 0.02   # fusion_query
    p["wq"] = jax.random.normal(keys[5], (E, E), jnp.float32) * 0.05
    p["bq"] = jax.random.normal(keys[6], (1, E), jnp.float32) * 0.05
    p["wk"] = jax.random.normal(keys[7], (E, E), jnp.float32) * 0.05
    p["bk"] = jax.random.normal(keys[8], (1, E), jnp.float32) * 0.05
    p["wv"] = jax.random.normal(keys[9], (E, E), jnp.float32) * 0.05
    p["bv"] = jax.random.normal(keys[10], (1, E), jnp.float32) * 0.05
    p["wo"] = jax.random.normal(keys[11], (E, E), jnp.float32) * 0.05
    p["bo"] = jax.random.normal(keys[12], (1, E), jnp.float32) * 0.05
    return p


if __name__ == "__main__":
    def run_case(B, D0, D1, E, H, block_b, key):
        k_par, k_m0, k_m1 = jax.random.split(key, 3)
        params = init_params(k_par, [D0, D1], E)
        mod0 = jax.random.normal(k_m0, (B, D0), jnp.float32)
        mod1 = jax.random.normal(k_m1, (B, D1), jnp.float32)
        # simulate missing modalities (never both on the same sample -> no NaN
        # divergence vs the reference)
        mod1 = mod1.at[3].set(0.0)          # text missing on sample 3
        mod0 = mod0.at[B - 1].set(0.0)      # image missing on last sample

        out = aecf_fusion_forward([mod0, mod1], [mod0, mod1], params,
                                  num_heads=H, block_b=block_b)
        out = jax.block_until_ready(out)

        img_present = jnp.linalg.norm(mod0, axis=1) > 1e-6
        txt_present = jnp.linalg.norm(mod1, axis=1) > 1e-6
        kpm = jnp.stack([~img_present, ~txt_present], axis=1)
        ref = reference(mod0, mod1, kpm, params, num_heads=H)

        assert out.shape == (B, E)
        # tolerance covers bf16 matmul operands + wrapper-side weight folding
        err = jnp.max(jnp.abs(out - ref))
        assert jnp.allclose(out, ref, rtol=3e-2, atol=3e-3), f"max abs err {err}"

    key = jax.random.PRNGKey(0)
    k1, k2 = jax.random.split(key)
    # small case: single grid step, lane-packed output (P=4 -> 128-lane stores)
    run_case(B=16, D0=40, D1=24, E=32, H=8, block_b=None, key=k1)
    # pipelined case: grid=4, exercises multi-block packing + parallel batch axis
    run_case(B=256, D0=40, D1=24, E=32, H=8, block_b=64, key=k2)

    print("KERNEL_OK")
</pallas_src>

<mosaic_0001>
module attributes {stable_mosaic.version = 11 : i64} {
  func.func @kernel(%arg0: i32, %arg1: memref<32x67xbf16, #tpu.memory_space<vmem>>, %arg2: memref<67x130xbf16, #tpu.memory_space<vmem>>, %arg3: memref<130x8xbf16, #tpu.memory_space<vmem>>, %arg4: memref<130x8xbf16, #tpu.memory_space<vmem>>, %arg5: memref<8x130xbf16, #tpu.memory_space<vmem>>, %arg6: memref<8x130xbf16, #tpu.memory_space<vmem>>, %arg7: memref<130x32xbf16, #tpu.memory_space<vmem>>, %arg8: memref<1x32xf32, #tpu.memory_space<vmem>>, %arg9: memref<8x128xf32, #tpu.memory_space<vmem>>) attributes {dimension_semantics = [#tpu.dimension_semantics<parallel>], iteration_bounds = array<i64: 1>, scalar_prefetch = 0 : i64, scratch_operands = 0 : i64, tpu.core_type = #tpu.core_type<tc>, window_params = [{transform_indices = @transform_0, window_bounds = array<i64: 32, 67>}, {pipeline_mode = #tpu.pipeline_mode<synchronous>, transform_indices = @transform_1, window_bounds = array<i64: 67, 130>}, {pipeline_mode = #tpu.pipeline_mode<synchronous>, transform_indices = @transform_2, window_bounds = array<i64: 130, 8>}, {pipeline_mode = #tpu.pipeline_mode<synchronous>, transform_indices = @transform_3, window_bounds = array<i64: 130, 8>}, {pipeline_mode = #tpu.pipeline_mode<synchronous>, transform_indices = @transform_4, window_bounds = array<i64: 8, 130>}, {pipeline_mode = #tpu.pipeline_mode<synchronous>, transform_indices = @transform_5, window_bounds = array<i64: 8, 130>}, {pipeline_mode = #tpu.pipeline_mode<synchronous>, transform_indices = @transform_6, window_bounds = array<i64: 130, 32>}, {pipeline_mode = #tpu.pipeline_mode<synchronous>, transform_indices = @transform_7, window_bounds = array<i64: 1, 32>}, {transform_indices = @transform_8, window_bounds = array<i64: 8, 128>}]} {
    %c0 = arith.constant 0 : index
    %c0_0 = arith.constant 0 : index
    %0 = vector.load %arg1[%c0, %c0_0] : memref<32x67xbf16, #tpu.memory_space<vmem>>, vector<32x67xbf16>
    %c0_1 = arith.constant 0 : index
    %c0_2 = arith.constant 0 : index
    %1 = vector.load %arg2[%c0_1, %c0_2] : memref<67x130xbf16, #tpu.memory_space<vmem>>, vector<67x130xbf16>
    %cst = arith.constant dense<0.000000e+00> : vector<32x130xf32>
    %2 = tpu.matmul %0, %1, %cst {dimension_numbers = #tpu.dot_dimension_numbers<[1], [0], [0], [1], [0, 0, 1, 1], [], []>} : vector<32x67xbf16>, vector<67x130xbf16>, vector<32x130xf32> -> vector<32x130xf32>
    %3 = arith.truncf %2 : vector<32x130xf32> to vector<32x130xbf16>
    %c0_3 = arith.constant 0 : index
    %c0_4 = arith.constant 0 : index
    %4 = vector.load %arg3[%c0_3, %c0_4] : memref<130x8xbf16, #tpu.memory_space<vmem>>, vector<130x8xbf16>
    %cst_5 = arith.constant dense<0.000000e+00> : vector<32x8xf32>
    %5 = tpu.matmul %3, %4, %cst_5 {dimension_numbers = #tpu.dot_dimension_numbers<[1], [0], [0], [1], [0, 0, 1, 1], [], []>} : vector<32x130xbf16>, vector<130x8xbf16>, vector<32x8xf32> -> vector<32x8xf32>
    %c0_6 = arith.constant 0 : index
    %c0_7 = arith.constant 0 : index
    %6 = vector.load %arg4[%c0_6, %c0_7] : memref<130x8xbf16, #tpu.memory_space<vmem>>, vector<130x8xbf16>
    %cst_8 = arith.constant dense<0.000000e+00> : vector<32x8xf32>
    %7 = tpu.matmul %3, %6, %cst_8 {dimension_numbers = #tpu.dot_dimension_numbers<[1], [0], [0], [1], [0, 0, 1, 1], [], []>} : vector<32x130xbf16>, vector<130x8xbf16>, vector<32x8xf32> -> vector<32x8xf32>
    %8 = arith.maximumf %5, %7 : vector<32x8xf32>
    %9 = arith.subf %5, %8 : vector<32x8xf32>
    %10 = math.exp %9 : vector<32x8xf32>
    %11 = arith.subf %7, %8 : vector<32x8xf32>
    %12 = math.exp %11 : vector<32x8xf32>
    %13 = arith.addf %10, %12 : vector<32x8xf32>
    %14 = tpu.reciprocal %13 : vector<32x8xf32> -> vector<32x8xf32>
    %15 = arith.mulf %10, %14 : vector<32x8xf32>
    %16 = arith.truncf %15 : vector<32x8xf32> to vector<32x8xbf16>
    %17 = arith.mulf %12, %14 : vector<32x8xf32>
    %18 = arith.truncf %17 : vector<32x8xf32> to vector<32x8xbf16>
    %c0_9 = arith.constant 0 : index
    %c0_10 = arith.constant 0 : index
    %19 = vector.load %arg5[%c0_9, %c0_10] : memref<8x130xbf16, #tpu.memory_space<vmem>>, vector<8x130xbf16>
    %cst_11 = arith.constant dense<0.000000e+00> : vector<32x130xf32>
    %20 = tpu.matmul %16, %19, %cst_11 {dimension_numbers = #tpu.dot_dimension_numbers<[1], [0], [0], [1], [0, 0, 1, 1], [], []>} : vector<32x8xbf16>, vector<8x130xbf16>, vector<32x130xf32> -> vector<32x130xf32>
    %c0_12 = arith.constant 0 : index
    %c0_13 = arith.constant 0 : index
    %21 = vector.load %arg6[%c0_12, %c0_13] : memref<8x130xbf16, #tpu.memory_space<vmem>>, vector<8x130xbf16>
    %cst_14 = arith.constant dense<0.000000e+00> : vector<32x130xf32>
    %22 = tpu.matmul %18, %21, %cst_14 {dimension_numbers = #tpu.dot_dimension_numbers<[1], [0], [0], [1], [0, 0, 1, 1], [], []>} : vector<32x8xbf16>, vector<8x130xbf16>, vector<32x130xf32> -> vector<32x130xf32>
    %23 = arith.addf %20, %22 : vector<32x130xf32>
    %24 = arith.mulf %23, %2 : vector<32x130xf32>
    %25 = arith.truncf %24 : vector<32x130xf32> to vector<32x130xbf16>
    %c0_15 = arith.constant 0 : index
    %c0_16 = arith.constant 0 : index
    %26 = vector.load %arg7[%c0_15, %c0_16] : memref<130x32xbf16, #tpu.memory_space<vmem>>, vector<130x32xbf16>
    %cst_17 = arith.constant dense<0.000000e+00> : vector<32x32xf32>
    %27 = tpu.matmul %25, %26, %cst_17 {dimension_numbers = #tpu.dot_dimension_numbers<[1], [0], [0], [1], [0, 0, 1, 1], [], []>} : vector<32x130xbf16>, vector<130x32xbf16>, vector<32x32xf32> -> vector<32x32xf32>
    %c0_18 = arith.constant 0 : index
    %c0_19 = arith.constant 0 : index
    %28 = vector.load %arg8[%c0_18, %c0_19] : memref<1x32xf32, #tpu.memory_space<vmem>>, vector<1x32xf32>
    %29 = vector.broadcast %28 : vector<1x32xf32> to vector<32x32xf32>
    %30 = arith.addf %27, %29 : vector<32x32xf32>
    %31 = vector.extract_strided_slice %30 {offsets = [0, 0], sizes = [8, 32], strides = [1, 1]} : vector<32x32xf32> to vector<8x32xf32>
    %32 = vector.extract_strided_slice %30 {offsets = [8, 0], sizes = [8, 32], strides = [1, 1]} : vector<32x32xf32> to vector<8x32xf32>
    %33 = vector.extract_strided_slice %30 {offsets = [16, 0], sizes = [8, 32], strides = [1, 1]} : vector<32x32xf32> to vector<8x32xf32>
    %34 = vector.extract_strided_slice %30 {offsets = [24, 0], sizes = [8, 32], strides = [1, 1]} : vector<32x32xf32> to vector<8x32xf32>
    %35 = tpu.concatenate %31, %32, %33, %34 in 1 : vector<8x32xf32>, vector<8x32xf32>, vector<8x32xf32>, vector<8x32xf32> -> vector<8x128xf32>
    %c0_20 = arith.constant 0 : index
    %c0_21 = arith.constant 0 : index
    %36 = vector.load %arg9[%c0_20, %c0_21] : memref<8x128xf32, #tpu.memory_space<vmem>>, vector<8x128xf32>
    tpu.vector_store %arg9[%c0_20, %c0_21], %35 {strides = array<i32>} : memref<8x128xf32, #tpu.memory_space<vmem>>, vector<8x128xf32>,
    return
  }
  func.func @transform_0(%arg0: i32) -> (i32, i32) {
    %c0_i32 = arith.constant 0 : i32
    %c0_i32_0 = arith.constant 0 : i32
    return %arg0, %c0_i32 : i32, i32
  }
  func.func @transform_1(%arg0: i32) -> (i32, i32) {
    %c0_i32 = arith.constant 0 : i32
    %c0_i32_0 = arith.constant 0 : i32
    %c0_i32_1 = arith.constant 0 : i32
    return %c0_i32, %c0_i32_0 : i32, i32
  }
  func.func @transform_2(%arg0: i32) -> (i32, i32) {
    %c0_i32 = arith.constant 0 : i32
    %c0_i32_0 = arith.constant 0 : i32
    %c0_i32_1 = arith.constant 0 : i32
    return %c0_i32, %c0_i32_0 : i32, i32
  }
  func.func @transform_3(%arg0: i32) -> (i32, i32) {
    %c0_i32 = arith.constant 0 : i32
    %c0_i32_0 = arith.constant 0 : i32
    %c0_i32_1 = arith.constant 0 : i32
    return %c0_i32, %c0_i32_0 : i32, i32
  }
  func.func @transform_4(%arg0: i32) -> (i32, i32) {
    %c0_i32 = arith.constant 0 : i32
    %c0_i32_0 = arith.constant 0 : i32
    %c0_i32_1 = arith.constant 0 : i32
    return %c0_i32, %c0_i32_0 : i32, i32
  }
  func.func @transform_5(%arg0: i32) -> (i32, i32) {
    %c0_i32 = arith.constant 0 : i32
    %c0_i32_0 = arith.constant 0 : i32
    %c0_i32_1 = arith.constant 0 : i32
    return %c0_i32, %c0_i32_0 : i32, i32
  }
  func.func @transform_6(%arg0: i32) -> (i32, i32) {
    %c0_i32 = arith.constant 0 : i32
    %c0_i32_0 = arith.constant 0 : i32
    %c0_i32_1 = arith.constant 0 : i32
    return %c0_i32, %c0_i32_0 : i32, i32
  }
  func.func @transform_7(%arg0: i32) -> (i32, i32) {
    %c0_i32 = arith.constant 0 : i32
    %c0_i32_0 = arith.constant 0 : i32
    %c0_i32_1 = arith.constant 0 : i32
    return %c0_i32, %c0_i32_0 : i32, i32
  }
  func.func @transform_8(%arg0: i32) -> (i32, i32) {
    %c0_i32 = arith.constant 0 : i32
    %c0_i32_0 = arith.constant 0 : i32
    return %arg0, %c0_i32 : i32, i32
  }
}

</mosaic_0001>

<llo_original>
// kernel: tpu_custom_call.1
$region0: #{tpu_custom_call.1}
  #allocation0 [shape = 'u32[]', space=smem, size = 0x4, offset = 0x4, fixed_abs, tag = 'smem constant byte address 0x4 - core index']
  #allocation1 [shape = 'u32[144,128]{1,0:T(1,128)}', space=vmem, size = 0x12000, scoped, tag = 'internal scratch']
  %s0 = inlined_call_operand.vmem [shape: bf16[32,67], index: 0, kind: input, shape index: {}]
  %s1 = inlined_call_operand.vmem [shape: bf16[67,130], index: 1, kind: input, shape index: {}]
  %s2 = inlined_call_operand.vmem [shape: bf16[130,8], index: 2, kind: input, shape index: {}]
  %s3 = inlined_call_operand.vmem [shape: bf16[130,8], index: 3, kind: input, shape index: {}]
  %s4 = inlined_call_operand.vmem [shape: bf16[8,130], index: 4, kind: input, shape index: {}]
  %s5 = inlined_call_operand.vmem [shape: bf16[8,130], index: 5, kind: input, shape index: {}]
  %s6 = inlined_call_operand.vmem [shape: bf16[130,32], index: 6, kind: input, shape index: {}]
  %s7 = inlined_call_operand.vmem [shape: f32[1,32], index: 7, kind: input, shape index: {}]
  %s8 = inlined_call_operand.hbm [shape: f32[8,128], index: 8, kind: output, shape index: {}]
  %s9 = sld [smem:[#allocation0]]
  $region42: #{tpu_custom_call.1} parent=0
    _
  %s11 = ssub.s32 1, %s9
  %s12 = scalar_select 0, %s11, %s9
  $region1: #{tpu_custom_call.1} parent=0
    #allocation2 [shape = 'u8[4096]{0}', space=vmem, size = 0x1000, scoped, tag = 'output window, operand 0, single buffered']
    #allocation3 [shape = 's32[1]{0}', space=sflag, size = 0x4, scoped, tag = 'scoped memory for tpu_custom_call.1']
    %13 = vsyncpa [#allocation3], 0
    // Predicated region
    $region2: #{tpu_custom_call.1} parent=1 // pred_check
      _
    $region3: #{tpu_custom_call.1} parent=1 // pred_check_branch
      %15 = sbr.rel (0) target = $region5
    $region4: #{tpu_custom_call.1} parent=1 // pred_region
      _
    $region5: #{tpu_custom_call.1} parent=1 // pred_fallthru
      _
    // Predicated region
    $region6: #{tpu_custom_call.1} parent=1 // pred_check
      _
    $region7: #{tpu_custom_call.1} parent=1 // pred_check_branch
      %17 = sbr.rel (0) target = $region9
    $region8: #{tpu_custom_call.1} parent=1 // pred_region
      _
    $region9: #{tpu_custom_call.1} parent=1 // pred_fallthru
      _
    // Predicated region
    $region10: #{tpu_custom_call.1} parent=1 // pred_check
      _
    $region11: #{tpu_custom_call.1} parent=1 // pred_check_branch
      %19 = sbr.rel (0) target = $region13
    $region12: #{tpu_custom_call.1} parent=1 // pred_region
      _
    $region13: #{tpu_custom_call.1} parent=1 // pred_fallthru
      _
    // Predicated region
    $region14: #{tpu_custom_call.1} parent=1 // pred_check
      _
    $region15: #{tpu_custom_call.1} parent=1 // pred_check_branch
      %21 = sbr.rel (0) target = $region17
    $region16: #{tpu_custom_call.1} parent=1 // pred_region
      _
    $region17: #{tpu_custom_call.1} parent=1 // pred_fallthru
      _
    // Predicated region
    $region18: #{tpu_custom_call.1} parent=1 // pred_check
      _
    $region19: #{tpu_custom_call.1} parent=1 // pred_check_branch
      %23 = sbr.rel (0) target = $region21
    $region20: #{tpu_custom_call.1} parent=1 // pred_region
      _
    $region21: #{tpu_custom_call.1} parent=1 // pred_fallthru
      _
    // Predicated region
    $region22: #{tpu_custom_call.1} parent=1 // pred_check
      _
    $region23: #{tpu_custom_call.1} parent=1 // pred_check_branch
      %25 = sbr.rel (0) target = $region25
    $region24: #{tpu_custom_call.1} parent=1 // pred_region
      _
    $region25: #{tpu_custom_call.1} parent=1 // pred_fallthru
      _
    // Predicated region
    $region26: #{tpu_custom_call.1} parent=1 // pred_check
      _
    $region27: #{tpu_custom_call.1} parent=1 // pred_check_branch
      %27 = sbr.rel (0) target = $region29
    $region28: #{tpu_custom_call.1} parent=1 // pred_region
      _
    $region29: #{tpu_custom_call.1} parent=1 // pred_fallthru
      _
    // Predicated region
    $region30: #{tpu_custom_call.1} parent=1 // pred_check
      _
    $region31: #{tpu_custom_call.1} parent=1 // pred_check_branch
      %29 = sbr.rel (0) target = $region33
    $region32: #{tpu_custom_call.1} parent=1 // pred_region
      _
    $region33: #{tpu_custom_call.1} parent=1 // pred_fallthru
      _
    %v31 = vld [vmem:[%s0] sm:$0xf]
    %v32 = vld [vmem:[%s0 + $0x4] sm:$0xf]
    %v33 = vld [vmem:[%s0 + $0x8] sm:$0xf]
    %v34 = vld [vmem:[%s0 + $0xc] sm:$0xf]
    %v35 = vld [vmem:[%s1] sm:$0xff]
    %v36 = vld [vmem:[%s1 + $0x8] sm:$0xff]
    %v37 = vld [vmem:[%s1 + $0x10] sm:$0xff]
    %v38 = vld [vmem:[%s1 + $0x18] sm:$0xff]
    %v39 = vld [vmem:[%s1 + $0x20] sm:$0xff]
    %v40 = vld [vmem:[%s1 + $0x28] sm:$0xff]
    %v41 = vld [vmem:[%s1 + $0x30] sm:$0xff]
    %v42 = vld [vmem:[%s1 + $0x38] sm:$0xff]
    %v43 = vld [vmem:[%s1 + $0x40] sm:$0x33]
    %v48 = vunpack.c.l.b16 %v31
    %v49 = vunpack.c.l.b16 %v32
    %v50 = vunpack.c.l.b16 %v33
    %v51 = vunpack.c.l.b16 %v34
    %v52 = vpack.c.b16 %v49, %v48
    %v53 = vpack.c.b16 %v51, %v50
    %v63 = vunpack.c.l.b16 %v35
    %v64 = vunpack.c.h.b16 %v35
    %v65 = vunpack.c.l.b16 %v36
    %v66 = vunpack.c.h.b16 %v36
    %v67 = vunpack.c.l.b16 %v37
    %v68 = vunpack.c.h.b16 %v37
    %v69 = vunpack.c.l.b16 %v38
    %v70 = vunpack.c.h.b16 %v38
    %v71 = vunpack.c.l.b16 %v39
    %v72 = vunpack.c.h.b16 %v39
    %v73 = vunpack.c.l.b16 %v40
    %v74 = vunpack.c.h.b16 %v40
    %v75 = vunpack.c.l.b16 %v41
    %v76 = vunpack.c.h.b16 %v41
    %v77 = vunpack.c.l.b16 %v42
    %v78 = vunpack.c.h.b16 %v42
    %v79 = vunpack.c.l.b16 %v43
    %v80 = vunpack.c.h.b16 %v43
    %v81 = vpack.c.b16 %v65, %v63
    %v82 = vpack.c.b16 %v66, %v64
    %v83 = vpack.c.b16 %v69, %v67
    %v84 = vpack.c.b16 %v70, %v68
    %v85 = vpack.c.b16 %v73, %v71
    %v86 = vpack.c.b16 %v74, %v72
    %v87 = vpack.c.b16 %v77, %v75
    %v88 = vpack.c.b16 %v78, %v76
    %v89 = vpack.c.b16 %v79, %v79
    %v90 = vpack.c.b16 %v80, %v80
    %vm99 = vcmask 547840
    %v101 = vsel %vm99, %v52, 0
    %v104 = vsel %vm99, %v53, 0
    %vm106 = vcmask 1040384
    %vm107 = vcmask 1041408
    %v108 = vsel %vm106, 4294967295, 65535
    %v109 = vsel %vm107, %v108, 0
    %v111 = vand.u32 %v89, %v109
    %v114 = vand.u32 %v90, %v109
    %116 = vmatprep.subr.bf16.mxu0 %v82
    %117 = vmatpush1.bf16.msra.mxu0 %v81
    %118 = vmatprep.subr.bf16.mxu0 %v84
    %119 = vmatpush1.bf16.msra.mxu0 %v83
    %120 = vmatprep.subr.bf16.mxu0 %v86
    %121 = vmatpush1.bf16.msra.mxu0 %v85
    %122 = vmatprep.subr.bf16.mxu0 %v88
    %123 = vmatpush1.bf16.msra.mxu0 %v87
    %124 = vmatprep.subr.bf16.mxu0 %v114
    %125 = vmatpush1.bf16.msra.mxu0 %v111
    %126 = vmatprep.subr.bf16.mxu0 0
    %127 = vmatpush1.bf16.msra.mxu0 0
    %128 = vmatprep.subr.bf16.mxu0 0
    %129 = vmatpush1.bf16.msra.mxu0 0
    %130 = vmatprep.subr.bf16.mxu0 0
    %131 = vmatpush1.bf16.msra.mxu0 0
    %132 = vmatprep.subr.bf16.mxu0 0
    %133 = vmatpush1.bf16.msra.mxu0 0
    %134 = vmatprep.subr.bf16.mxu0 0
    %135 = vmatpush1.bf16.msra.mxu0 0
    %136 = vmatprep.subr.bf16.mxu0 0
    %137 = vmatpush1.bf16.msra.mxu0 0
    %138 = vmatprep.subr.bf16.mxu0 0
    %139 = vmatpush1.bf16.msra.mxu0 0
    %140 = vmatprep.subr.bf16.mxu0 0
    %141 = vmatpush1.bf16.msra.mxu0 0
    %142 = vmatprep.subr.bf16.mxu0 0
    %143 = vmatpush1.bf16.msra.mxu0 0
    %144 = vmatprep.subr.bf16.mxu0 0
    %145 = vmatpush1.bf16.msra.mxu0 0
    %146 = vmatprep.subr.bf16.mxu0 0
    %147 = vmatpush1.bf16.msra.mxu0 0
    %148 = vmatprep.mubr.bf16.mxu0 0
    %149 = vmatmul.mubr.bf16.gmra.mrb[0].mxu0 %v101
    %v150 = vpop.f32.mrb[0].mxu0
    %v151 = vadd.f32 0.0, %v150
    %v152 = vpop.f32.mrb[0].mxu0
    %v153 = vadd.f32 0.0, %v152
    %v154 = vpop.f32.mrb[0].mxu0
    %v155 = vadd.f32 0.0, %v154
    %v156 = vpop.f32.mrb[0].mxu0
    %v157 = vadd.f32 0.0, %v156
    %158 = vmatprep.mubr.bf16.mxu0 0
    %159 = vmatmul.mubr.bf16.gmra.mrb[0].mxu0 %v104
    %v160 = vpop.f32.mrb[0].mxu0
    %v161 = vadd.f32 0.0, %v160
    %v162 = vpop.f32.mrb[0].mxu0
    %v163 = vadd.f32 0.0, %v162
    %v164 = vpop.f32.mrb[0].mxu0
    %v165 = vadd.f32 0.0, %v164
    %v166 = vpop.f32.mrb[0].mxu0
    %v167 = vadd.f32 0.0, %v166
    %168 = vdwg.mxu0
    %v169 = vpack.c.bf16 %v155, %v151
    %v170 = vpack.c.bf16 %v157, %v153
    %v171 = vpack.c.bf16 %v165, %v161
    %v172 = vpack.c.bf16 %v167, %v163
    %v173 = vld [vmem:[%s2] sm:$0xf]
    %v174 = vld [vmem:[%s2 + $0x4] sm:$0xf]
    %v175 = vld [vmem:[%s2 + $0x8] sm:$0xf]
    %v176 = vld [vmem:[%s2 + $0xc] sm:$0xf]
    %v177 = vld [vmem:[%s2 + $0x10] sm:$0xf]
    %v178 = vld [vmem:[%s2 + $0x14] sm:$0xf]
    %v179 = vld [vmem:[%s2 + $0x18] sm:$0xf]
    %v180 = vld [vmem:[%s2 + $0x1c] sm:$0xf]
    %v181 = vld [vmem:[%s2 + $0x20] sm:$0xf]
    %v182 = vld [vmem:[%s2 + $0x24] sm:$0xf]
    %v183 = vld [vmem:[%s2 + $0x28] sm:$0xf]
    %v184 = vld [vmem:[%s2 + $0x2c] sm:$0xf]
    %v185 = vld [vmem:[%s2 + $0x30] sm:$0xf]
    %v186 = vld [vmem:[%s2 + $0x34] sm:$0xf]
    %v187 = vld [vmem:[%s2 + $0x38] sm:$0xf]
    %v188 = vld [vmem:[%s2 + $0x3c] sm:$0xf]
    %v189 = vld [vmem:[%s2 + $0x40] sm:$0x1]
    %v207 = vunpack.c.l.b16 %v173
    %v208 = vunpack.c.l.b16 %v174
    %v209 = vunpack.c.l.b16 %v175
    %v210 = vunpack.c.l.b16 %v176
    %v211 = vunpack.c.l.b16 %v177
    %v212 = vunpack.c.l.b16 %v178
    %v213 = vunpack.c.l.b16 %v179
    %v214 = vunpack.c.l.b16 %v180
    %v215 = vunpack.c.l.b16 %v181
    %v216 = vunpack.c.l.b16 %v182
    %v217 = vunpack.c.l.b16 %v183
    %v218 = vunpack.c.l.b16 %v184
    %v219 = vunpack.c.l.b16 %v185
    %v220 = vunpack.c.l.b16 %v186
    %v221 = vunpack.c.l.b16 %v187
    %v222 = vunpack.c.l.b16 %v188
    %v223 = vunpack.c.l.b16 %v189
    %v224 = vpack.c.b16 %v208, %v207
    %v225 = vpack.c.b16 %v210, %v209
    %v226 = vpack.c.b16 %v212, %v211
    %v227 = vpack.c.b16 %v214, %v213
    %v228 = vpack.c.b16 %v216, %v215
    %v229 = vpack.c.b16 %v218, %v217
    %v230 = vpack.c.b16 %v220, %v219
    %v231 = vpack.c.b16 %v222, %v221
    %v232 = vpack.c.b16 %v223, %v223
    %vm241 = vcmask 15360
    %v243 = vsel %vm241, %v170, 0
    %v246 = vsel %vm241, %v172, 0
    %v249 = vsel %vm106, %v232, 0
    %251 = vmatprep.subr.bf16.mxu0 0
    %252 = vmatpush1.bf16.msra.mxu0 %v224
    %253 = vmatprep.subr.bf16.mxu0 0
    %254 = vmatpush1.bf16.msra.mxu0 %v225
    %255 = vmatprep.subr.bf16.mxu0 0
    %256 = vmatpush1.bf16.msra.mxu0 %v226
    %257 = vmatprep.subr.bf16.mxu0 0
    %258 = vmatpush1.bf16.msra.mxu0 %v227
    %259 = vmatprep.subr.bf16.mxu0 0
    %260 = vmatpush1.bf16.msra.mxu0 %v228
    %261 = vmatprep.subr.bf16.mxu0 0
    %262 = vmatpush1.bf16.msra.mxu0 %v229
    %263 = vmatprep.subr.bf16.mxu0 0
    %264 = vmatpush1.bf16.msra.mxu0 %v230
    %265 = vmatprep.subr.bf16.mxu0 0
    %266 = vmatpush1.bf16.msra.mxu0 %v231
    %267 = vmatprep.subr.bf16.mxu0 0
    %268 = vmatpush1.bf16.msra.mxu0 %v249
    %269 = vmatprep.subr.bf16.mxu0 0
    %270 = vmatpush1.bf16.msra.mxu0 0
    %271 = vmatprep.subr.bf16.mxu0 0
    %272 = vmatpush1.bf16.msra.mxu0 0
    %273 = vmatprep.subr.bf16.mxu0 0
    %274 = vmatpush1.bf16.msra.mxu0 0
    %275 = vmatprep.subr.bf16.mxu0 0
    %276 = vmatpush1.bf16.msra.mxu0 0
    %277 = vmatprep.subr.bf16.mxu0 0
    %278 = vmatpush1.bf16.msra.mxu0 0
    %279 = vmatprep.subr.bf16.mxu0 0
    %280 = vmatpush1.bf16.msra.mxu0 0
    %281 = vmatprep.subr.bf16.mxu0 0
    %282 = vmatpush1.bf16.msra.mxu0 0
    %283 = vmatprep.mubr.bf16.mxu0 %v243
    %284 = vmatmul.mubr.bf16.gmra.mrb[0].mxu0 %v169
    %v285 = vpop.f32.mrb[0].mxu0
    %v286 = vadd.f32 0.0, %v285
    %v287 = vpop.f32.mrb[0].mxu0
    %v288 = vpop.f32.mrb[0].mxu0
    %v289 = vadd.f32 0.0, %v288
    %v290 = vpop.f32.mrb[0].mxu0
    %291 = vmatprep.mubr.bf16.mxu0 %v246
    %292 = vmatmul.mubr.bf16.gmra.mrb[0].mxu0 %v171
    %v293 = vpop.f32.mrb[0].mxu0
    %v294 = vadd.f32 0.0, %v293
    %v295 = vpop.f32.mrb[0].mxu0
    %v296 = vpop.f32.mrb[0].mxu0
    %v297 = vadd.f32 0.0, %v296
    %v298 = vpop.f32.mrb[0].mxu0
    %299 = vdwg.mxu0
    %v300 = vld [vmem:[%s3] sm:$0xf]
    %v301 = vld [vmem:[%s3 + $0x4] sm:$0xf]
    %v302 = vld [vmem:[%s3 + $0x8] sm:$0xf]
    %v303 = vld [vmem:[%s3 + $0xc] sm:$0xf]
    %v304 = vld [vmem:[%s3 + $0x10] sm:$0xf]
    %v305 = vld [vmem:[%s3 + $0x14] sm:$0xf]
    %v306 = vld [vmem:[%s3 + $0x18] sm:$0xf]
    %v307 = vld [vmem:[%s3 + $0x1c] sm:$0xf]
    %v308 = vld [vmem:[%s3 + $0x20] sm:$0xf]
    %v309 = vld [vmem:[%s3 + $0x24] sm:$0xf]
    %v310 = vld [vmem:[%s3 + $0x28] sm:$0xf]
    %v311 = vld [vmem:[%s3 + $0x2c] sm:$0xf]
    %v312 = vld [vmem:[%s3 + $0x30] sm:$0xf]
    %v313 = vld [vmem:[%s3 + $0x34] sm:$0xf]
    %v314 = vld [vmem:[%s3 + $0x38] sm:$0xf]
    %v315 = vld [vmem:[%s3 + $0x3c] sm:$0xf]
    %v316 = vld [vmem:[%s3 + $0x40] sm:$0x1]
    %v334 = vunpack.c.l.b16 %v300
    %v335 = vunpack.c.l.b16 %v301
    %v336 = vunpack.c.l.b16 %v302
    %v337 = vunpack.c.l.b16 %v303
    %v338 = vunpack.c.l.b16 %v304
    %v339 = vunpack.c.l.b16 %v305
    %v340 = vunpack.c.l.b16 %v306
    %v341 = vunpack.c.l.b16 %v307
    %v342 = vunpack.c.l.b16 %v308
    %v343 = vunpack.c.l.b16 %v309
    %v344 = vunpack.c.l.b16 %v310
    %v345 = vunpack.c.l.b16 %v311
    %v346 = vunpack.c.l.b16 %v312
    %v347 = vunpack.c.l.b16 %v313
    %v348 = vunpack.c.l.b16 %v314
    %v349 = vunpack.c.l.b16 %v315
    %v350 = vunpack.c.l.b16 %v316
    %v351 = vpack.c.b16 %v335, %v334
    %v352 = vpack.c.b16 %v337, %v336
    %v353 = vpack.c.b16 %v339, %v338
    %v354 = vpack.c.b16 %v341, %v340
    %v355 = vpack.c.b16 %v343, %v342
    %v356 = vpack.c.b16 %v345, %v344
    %v357 = vpack.c.b16 %v347, %v346
    %v358 = vpack.c.b16 %v349, %v348
    %v359 = vpack.c.b16 %v350, %v350
    %v369 = vsel %vm106, %v359, 0
    %371 = vmatprep.subr.bf16.mxu0 0
    %372 = vmatpush1.bf16.msra.mxu0 %v351
    %373 = vmatprep.subr.bf16.mxu0 0
    %374 = vmatpush1.bf16.msra.mxu0 %v352
    %375 = vmatprep.subr.bf16.mxu0 0
    %376 = vmatpush1.bf16.msra.mxu0 %v353
    %377 = vmatprep.subr.bf16.mxu0 0
    %378 = vmatpush1.bf16.msra.mxu0 %v354
    %379 = vmatprep.subr.bf16.mxu0 0
    %380 = vmatpush1.bf16.msra.mxu0 %v355
    %381 = vmatprep.subr.bf16.mxu0 0
    %382 = vmatpush1.bf16.msra.mxu0 %v356
    %383 = vmatprep.subr.bf16.mxu0 0
    %384 = vmatpush1.bf16.msra.mxu0 %v357
    %385 = vmatprep.subr.bf16.mxu0 0
    %386 = vmatpush1.bf16.msra.mxu0 %v358
    %387 = vmatprep.subr.bf16.mxu0 0
    %388 = vmatpush1.bf16.msra.mxu0 %v369
    %389 = vmatprep.subr.bf16.mxu0 0
    %390 = vmatpush1.bf16.msra.mxu0 0
    %391 = vmatprep.subr.bf16.mxu0 0
    %392 = vmatpush1.bf16.msra.mxu0 0
    %393 = vmatprep.subr.bf16.mxu0 0
    %394 = vmatpush1.bf16.msra.mxu0 0
    %395 = vmatprep.subr.bf16.mxu0 0
    %396 = vmatpush1.bf16.msra.mxu0 0
    %397 = vmatprep.subr.bf16.mxu0 0
    %398 = vmatpush1.bf16.msra.mxu0 0
    %399 = vmatprep.subr.bf16.mxu0 0
    %400 = vmatpush1.bf16.msra.mxu0 0
    %401 = vmatprep.subr.bf16.mxu0 0
    %402 = vmatpush1.bf16.msra.mxu0 0
    %403 = vmatprep.mubr.bf16.mxu0 %v243
    %404 = vmatmul.mubr.bf16.gmra.mrb[0].mxu0 %v169
    %v405 = vpop.f32.mrb[0].mxu0
    %v406 = vadd.f32 0.0, %v405
    %v407 = vpop.f32.mrb[0].mxu0
    %v408 = vpop.f32.mrb[0].mxu0
    %v409 = vadd.f32 0.0, %v408
    %v410 = vpop.f32.mrb[0].mxu0
    %411 = vmatprep.mubr.bf16.mxu0 %v246
    %412 = vmatmul.mubr.bf16.gmra.mrb[0].mxu0 %v171
    %v413 = vpop.f32.mrb[0].mxu0
    %v414 = vadd.f32 0.0, %v413
    %v415 = vpop.f32.mrb[0].mxu0
    %v416 = vpop.f32.mrb[0].mxu0
    %v417 = vadd.f32 0.0, %v416
    %v418 = vpop.f32.mrb[0].mxu0
    %419 = vdwg.mxu0
    %v420 = vmax.f32 %v286, %v406
    %v421 = vmax.f32 %v289, %v409
    %v422 = vmax.f32 %v294, %v414
    %v423 = vmax.f32 %v297, %v417
    %v424 = vsub.f32 %v286, %v420
    %v425 = vsub.f32 %v289, %v421
    %v426 = vsub.f32 %v294, %v422
    %v427 = vsub.f32 %v297, %v423
    %v428 = vmul.f32 %v424, 1.442695
    %v429 = vpow.pop %v428
    %v430 = vmul.f32 %v425, 1.442695
    %v431 = vpow.pop %v430
    %v432 = vmul.f32 %v426, 1.442695
    %v433 = vpow.pop %v432
    %v434 = vmul.f32 %v427, 1.442695
    %v435 = vpow.pop %v434
    %v436 = vsub.f32 %v406, %v420
    %v437 = vsub.f32 %v409, %v421
    %v438 = vsub.f32 %v414, %v422
    %v439 = vsub.f32 %v417, %v423
    %v440 = vmul.f32 %v436, 1.442695
    %v441 = vpow.pop %v440
    %v442 = vmul.f32 %v437, 1.442695
    %v443 = vpow.pop %v442
    %v444 = vmul.f32 %v438, 1.442695
    %v445 = vpow.pop %v444
    %v446 = vmul.f32 %v439, 1.442695
    %v447 = vpow.pop %v446
    %v448 = vadd.f32 %v429, %v441
    %v449 = vadd.f32 %v431, %v443
    %v450 = vadd.f32 %v433, %v445
    %v451 = vadd.f32 %v435, %v447
    %v452 = vrcp.pop %v448
    %v453 = vrcp.pop %v449
    %v454 = vrcp.pop %v450
    %v455 = vrcp.pop %v451
    %v456 = vmul.f32 %v429, %v452
    %v457 = vmul.f32 %v431, %v453
    %v458 = vmul.f32 %v433, %v454
    %v459 = vmul.f32 %v435, %v455
    %v460 = vpack.c.bf16 %v457, %v456
    %v461 = vpack.c.bf16 %v459, %v458
    %v462 = vmul.f32 %v441, %v452
    %v463 = vmul.f32 %v443, %v453
    %v464 = vmul.f32 %v445, %v454
    %v465 = vmul.f32 %v447, %v455
    %v466 = vpack.c.bf16 %v463, %v462
    %v467 = vpack.c.bf16 %v465, %v464
    %v468 = vld [vmem:[%s4] sm:$0xff]
    %v469 = vld [vmem:[%s5] sm:$0xff]
    %v471 = vunpack.c.l.b16 %v469
    %v472 = vunpack.c.h.b16 %v469
    %v473 = vpack.c.b16 %v471, %v471
    %v474 = vpack.c.b16 %v472, %v472
    %vm475 = vcmask 64512
    %v477 = vsel %vm475, %v466, 0
    %v480 = vsel %vm475, %v467, 0
    %vm482 = vcmask 1043456
    %v484 = vsel %vm482, %v473, 0
    %v487 = vsel %vm482, %v474, 0
    %489 = vmatprep.subr.bf16.mxu0 %v487
    %490 = vmatpush1.bf16.msra.mxu0 %v484
    %491 = vmatprep.subr.bf16.mxu0 0
    %492 = vmatpush1.bf16.msra.mxu0 0
    %493 = vmatprep.subr.bf16.mxu0 0
    %494 = vmatpush1.bf16.msra.mxu0 0
    %495 = vmatprep.subr.bf16.mxu0 0
    %496 = vmatpush1.bf16.msra.mxu0 0
    %497 = vmatprep.subr.bf16.mxu0 0
    %498 = vmatpush1.bf16.msra.mxu0 0
    %499 = vmatprep.subr.bf16.mxu0 0
    %500 = vmatpush1.bf16.msra.mxu0 0
    %501 = vmatprep.subr.bf16.mxu0 0
    %502 = vmatpush1.bf16.msra.mxu0 0
    %503 = vmatprep.subr.bf16.mxu0 0
    %504 = vmatpush1.bf16.msra.mxu0 0
    %505 = vmatprep.subr.bf16.mxu0 0
    %506 = vmatpush1.bf16.msra.mxu0 0
    %507 = vmatprep.subr.bf16.mxu0 0
    %508 = vmatpush1.bf16.msra.mxu0 0
    %509 = vmatprep.subr.bf16.mxu0 0
    %510 = vmatpush1.bf16.msra.mxu0 0
    %511 = vmatprep.subr.bf16.mxu0 0
    %512 = vmatpush1.bf16.msra.mxu0 0
    %513 = vmatprep.subr.bf16.mxu0 0
    %514 = vmatpush1.bf16.msra.mxu0 0
    %515 = vmatprep.subr.bf16.mxu0 0
    %516 = vmatpush1.bf16.msra.mxu0 0
    %517 = vmatprep.subr.bf16.mxu0 0
    %518 = vmatpush1.bf16.msra.mxu0 0
    %519 = vmatprep.subr.bf16.mxu0 0
    %520 = vmatpush1.bf16.msra.mxu0 0
    %521 = vmatprep.mubr.bf16.mxu0 0
    %522 = vmatmul.mubr.bf16.gmra.mrb[0].mxu0 %v477
    %v523 = vpop.f32.mrb[0].mxu0
    %v524 = vadd.f32 0.0, %v523
    %v525 = vpop.f32.mrb[0].mxu0
    %v526 = vadd.f32 0.0, %v525
    %v527 = vpop.f32.mrb[0].mxu0
    %v528 = vadd.f32 0.0, %v527
    %v529 = vpop.f32.mrb[0].mxu0
    %v530 = vadd.f32 0.0, %v529
    %531 = vmatprep.mubr.bf16.mxu0 0
    %532 = vmatmul.mubr.bf16.gmra.mrb[0].mxu0 %v480
    %v533 = vpop.f32.mrb[0].mxu0
    %v534 = vadd.f32 0.0, %v533
    %v535 = vpop.f32.mrb[0].mxu0
    %v536 = vadd.f32 0.0, %v535
    %v537 = vpop.f32.mrb[0].mxu0
    %v538 = vadd.f32 0.0, %v537
    %v539 = vpop.f32.mrb[0].mxu0
    %v540 = vadd.f32 0.0, %v539
    %541 = vdwg.mxu0
    %v543 = vunpack.c.l.b16 %v468
    %v544 = vunpack.c.h.b16 %v468
    %v545 = vpack.c.b16 %v543, %v543
    %v546 = vpack.c.b16 %v544, %v544
    %v548 = vsel %vm475, %v460, 0
    %v551 = vsel %vm475, %v461, 0
    %v554 = vsel %vm482, %v545, 0
    %v557 = vsel %vm482, %v546, 0
    %559 = vmatprep.subr.bf16.mxu0 %v557
    %560 = vmatpush1.bf16.msra.mxu0 %v554
    %561 = vmatprep.subr.bf16.mxu0 0
    %562 = vmatpush1.bf16.msra.mxu0 0
    %563 = vmatprep.subr.bf16.mxu0 0
    %564 = vmatpush1.bf16.msra.mxu0 0
    %565 = vmatprep.subr.bf16.mxu0 0
    %566 = vmatpush1.bf16.msra.mxu0 0
    %567 = vmatprep.subr.bf16.mxu0 0
    %568 = vmatpush1.bf16.msra.mxu0 0
    %569 = vmatprep.subr.bf16.mxu0 0
    %570 = vmatpush1.bf16.msra.mxu0 0
    %571 = vmatprep.subr.bf16.mxu0 0
    %572 = vmatpush1.bf16.msra.mxu0 0
    %573 = vmatprep.subr.bf16.mxu0 0
    %574 = vmatpush1.bf16.msra.mxu0 0
    %575 = vmatprep.subr.bf16.mxu0 0
    %576 = vmatpush1.bf16.msra.mxu0 0
    %577 = vmatprep.subr.bf16.mxu0 0
    %578 = vmatpush1.bf16.msra.mxu0 0
    %579 = vmatprep.subr.bf16.mxu0 0
    %580 = vmatpush1.bf16.msra.mxu0 0
    %581 = vmatprep.subr.bf16.mxu0 0
    %582 = vmatpush1.bf16.msra.mxu0 0
    %583 = vmatprep.subr.bf16.mxu0 0
    %584 = vmatpush1.bf16.msra.mxu0 0
    %585 = vmatprep.subr.bf16.mxu0 0
    %586 = vmatpush1.bf16.msra.mxu0 0
    %587 = vmatprep.subr.bf16.mxu0 0
    %588 = vmatpush1.bf16.msra.mxu0 0
    %589 = vmatprep.subr.bf16.mxu0 0
    %590 = vmatpush1.bf16.msra.mxu0 0
    %591 = vmatprep.mubr.bf16.mxu0 0
    %592 = vmatmul.mubr.bf16.gmra.mrb[0].mxu0 %v548
    %v593 = vpop.f32.mrb[0].mxu0
    %v594 = vadd.f32 %v524, %v593
    %v595 = vpop.f32.mrb[0].mxu0
    %v596 = vadd.f32 %v526, %v595
    %v597 = vpop.f32.mrb[0].mxu0
    %v598 = vadd.f32 %v528, %v597
    %v599 = vpop.f32.mrb[0].mxu0
    %v600 = vadd.f32 %v530, %v599
    %601 = vmatprep.mubr.bf16.mxu0 0
    %602 = vmatmul.mubr.bf16.gmra.mrb[0].mxu0 %v551
    %v603 = vpop.f32.mrb[0].mxu0
    %v604 = vadd.f32 %v534, %v603
    %v605 = vpop.f32.mrb[0].mxu0
    %v606 = vadd.f32 %v536, %v605
    %v607 = vpop.f32.mrb[0].mxu0
    %v608 = vadd.f32 %v538, %v607
    %v609 = vpop.f32.mrb[0].mxu0
    %v610 = vadd.f32 %v540, %v609
    %611 = vdwg.mxu0
    %v612 = vmul.f32 %v594, %v151
    %v613 = vmul.f32 %v596, %v153
    %v614 = vmul.f32 %v598, %v155
    %v615 = vmul.f32 %v600, %v157
    %v616 = vmul.f32 %v604, %v161
    %v617 = vmul.f32 %v606, %v163
    %v618 = vmul.f32 %v608, %v165
    %v619 = vmul.f32 %v610, %v167
    %v620 = vpack.c.bf16 %v614, %v612
    %v621 = vpack.c.bf16 %v615, %v613
    %v622 = vpack.c.bf16 %v618, %v616
    %v623 = vpack.c.bf16 %v619, %v617
    %v624 = vld [vmem:[%s6] sm:$0xf]
    %v625 = vld [vmem:[%s6 + $0x4] sm:$0xf]
    %v626 = vld [vmem:[%s6 + $0x8] sm:$0xf]
    %v627 = vld [vmem:[%s6 + $0xc] sm:$0xf]
    %v628 = vld [vmem:[%s6 + $0x10] sm:$0xf]
    %v629 = vld [vmem:[%s6 + $0x14] sm:$0xf]
    %v630 = vld [vmem:[%s6 + $0x18] sm:$0xf]
    %v631 = vld [vmem:[%s6 + $0x1c] sm:$0xf]
    %v632 = vld [vmem:[%s6 + $0x20] sm:$0xf]
    %v633 = vld [vmem:[%s6 + $0x24] sm:$0xf]
    %v634 = vld [vmem:[%s6 + $0x28] sm:$0xf]
    %v635 = vld [vmem:[%s6 + $0x2c] sm:$0xf]
    %v636 = vld [vmem:[%s6 + $0x30] sm:$0xf]
    %v637 = vld [vmem:[%s6 + $0x34] sm:$0xf]
    %v638 = vld [vmem:[%s6 + $0x38] sm:$0xf]
    %v639 = vld [vmem:[%s6 + $0x3c] sm:$0xf]
    %v640 = vld [vmem:[%s6 + $0x40] sm:$0x1]
    %v641 = vld [vmem:[%s7] sm:$0x1]
    %v643 = vlaneseq
    %v644 = vshrl.u32 %v643, 7
    %v645 = vsub.s32 0, %v644
    %v646 = vrot.slane %v641, %v645
    %v665 = vunpack.c.l.b16 %v624
    %v666 = vunpack.c.l.b16 %v625
    %v667 = vunpack.c.l.b16 %v626
    %v668 = vunpack.c.l.b16 %v627
    %v669 = vunpack.c.l.b16 %v628
    %v670 = vunpack.c.l.b16 %v629
    %v671 = vunpack.c.l.b16 %v630
    %v672 = vunpack.c.l.b16 %v631
    %v673 = vunpack.c.l.b16 %v632
    %v674 = vunpack.c.l.b16 %v633
    %v675 = vunpack.c.l.b16 %v634
    %v676 = vunpack.c.l.b16 %v635
    %v677 = vunpack.c.l.b16 %v636
    %v678 = vunpack.c.l.b16 %v637
    %v679 = vunpack.c.l.b16 %v638
    %v680 = vunpack.c.l.b16 %v639
    %v681 = vunpack.c.l.b16 %v640
    %v682 = vpack.c.b16 %v666, %v665
    %v683 = vpack.c.b16 %v668, %v667
    %v684 = vpack.c.b16 %v670, %v669
    %v685 = vpack.c.b16 %v672, %v671
    %v686 = vpack.c.b16 %v674, %v673
    %v687 = vpack.c.b16 %v676, %v675
    %v688 = vpack.c.b16 %v678, %v677
    %v689 = vpack.c.b16 %v680, %v679
    %v690 = vpack.c.b16 %v681, %v681
    %v700 = vsel %vm241, %v621, 0
    %v703 = vsel %vm241, %v623, 0
    %v706 = vsel %vm106, %v690, 0
    %708 = vmatprep.subr.bf16.mxu0 0
    %709 = vmatpush1.bf16.msra.mxu0 %v682
    %710 = vmatprep.subr.bf16.mxu0 0
    %711 = vmatpush1.bf16.msra.mxu0 %v683
    %712 = vmatprep.subr.bf16.mxu0 0
    %713 = vmatpush1.bf16.msra.mxu0 %v684
    %714 = vmatprep.subr.bf16.mxu0 0
    %715 = vmatpush1.bf16.msra.mxu0 %v685
    %716 = vmatprep.subr.bf16.mxu0 0
    %717 = vmatpush1.bf16.msra.mxu0 %v686
    %718 = vmatprep.subr.bf16.mxu0 0
    %719 = vmatpush1.bf16.msra.mxu0 %v687
    %720 = vmatprep.subr.bf16.mxu0 0
    %721 = vmatpush1.bf16.msra.mxu0 %v688
    %722 = vmatprep.subr.bf16.mxu0 0
    %723 = vmatpush1.bf16.msra.mxu0 %v689
    %724 = vmatprep.subr.bf16.mxu0 0
    %725 = vmatpush1.bf16.msra.mxu0 %v706
    %726 = vmatprep.subr.bf16.mxu0 0
    %727 = vmatpush1.bf16.msra.mxu0 0
    %728 = vmatprep.subr.bf16.mxu0 0
    %729 = vmatpush1.bf16.msra.mxu0 0
    %730 = vmatprep.subr.bf16.mxu0 0
    %731 = vmatpush1.bf16.msra.mxu0 0
    %732 = vmatprep.subr.bf16.mxu0 0
    %733 = vmatpush1.bf16.msra.mxu0 0
    %734 = vmatprep.subr.bf16.mxu0 0
    %735 = vmatpush1.bf16.msra.mxu0 0
    %736 = vmatprep.subr.bf16.mxu0 0
    %737 = vmatpush1.bf16.msra.mxu0 0
    %738 = vmatprep.subr.bf16.mxu0 0
    %739 = vmatpush1.bf16.msra.mxu0 0
    %740 = vmatprep.mubr.bf16.mxu0 %v700
    %741 = vmatmul.mubr.bf16.gmra.mrb[0].mxu0 %v620
    %v742 = vpop.f32.mrb[0].mxu0
    %v743 = vadd.f32 %v646, %v742
    %v744 = vpop.f32.mrb[0].mxu0
    %v745 = vpop.f32.mrb[0].mxu0
    %v746 = vadd.f32 %v646, %v745
    %v747 = vpop.f32.mrb[0].mxu0
    %748 = vmatprep.mubr.bf16.mxu0 %v703
    %749 = vmatmul.mubr.bf16.gmra.mrb[0].mxu0 %v622
    %v750 = vpop.f32.mrb[0].mxu0
    %v751 = vadd.f32 %v646, %v750
    %v752 = vpop.f32.mrb[0].mxu0
    %v753 = vpop.f32.mrb[0].mxu0
    %v754 = vadd.f32 %v646, %v753
    %v755 = vpop.f32.mrb[0].mxu0
    %756 = vdwg.mxu0
    %758 = vrot.lane.b32.xlu0 %v746, 32
    %v759 = vpop.permute.xlu0 %758
    %762 = vrot.lane.b32.xlu0 %v751, 64
    %v763 = vpop.permute.xlu0 %762
    %766 = vrot.lane.b32.xlu0 %v754, 96
    %v767 = vpop.permute.xlu0 %766
    %vm769 = vcmask 261120
    %v770 = vsel %vm769, %v743, %v759
    %vm771 = vcmask 523264
    %v772 = vsel %vm771, %v770, %v763
    %vm773 = vcmask 785408
    %v774 = vsel %vm773, %v772, %v767
    %775 = vst [vmem:[#allocation2] sm:$0xff] %v774
    // Predicated region
    $region34: #{tpu_custom_call.1} parent=1 // pred_check
      _
    $region35: #{tpu_custom_call.1} parent=1 // pred_check_branch
      %777 = sbr.rel (0) target = $region37
    $region36: #{tpu_custom_call.1} parent=1 // pred_region
      %s779 = ssub.s32 128, 128
      %780 = vsyncadd [#allocation3], %s779
      %s782 = sshll.u32 [#allocation2], 4
      %s783 = int_to_ptr.vmem [resolvable:$true] %s782
      %785 = dma.vmem_to_hbm [thread:$0]  %s783, 128, %s8, [#allocation3]
    $region37: #{tpu_custom_call.1} parent=1 // pred_fallthru
      _
    // Predicated region
    $region38: #{tpu_custom_call.1} parent=1 // pred_check
      _
    $region39: #{tpu_custom_call.1} parent=1 // pred_check_branch
      %787 = sbr.rel (0) target = $region41
    $region40: #{tpu_custom_call.1} parent=1 // pred_region
      %788 = dma.done [#allocation3], 128
    $region41: #{tpu_custom_call.1} parent=1 // pred_fallthru
      _
    %789 = vsyncpa [#allocation3], 1

</llo_original>
